<compile_context>
chip_gen: v7x
topology: tpu7x:2x2x1
jax: 0.10.0
libtpu: 0.0.40
codegen_flags: <defaults>
</compile_context>

<pallas_src>
import math

import jax
import jax.numpy as jnp
from jax.experimental import pallas as pl
from jax.experimental.pallas import tpu as pltpu


def _discriminator_kernel(feat_ref, ws_ref, out_ref):
    # feat_ref: (tb, 128, H)  node-embedding rows, hidden dim in lanes
    # ws_ref:   (1, H)        precomputed W @ summary
    # out_ref:  (tb, 128)     lane-dense score tile
    feat = feat_ref[...].astype(jnp.float32)                 # (tb, 128, H)
    ws = ws_ref[...].astype(jnp.float32).reshape(1, 1, -1)   # (1, 1, H)
    # VPU multiply + lane reduction; an MXU (tn,H)@(H,1) would waste 255/256
    # output columns and force a 1-lane column result layout.
    scores = jnp.sum(feat * ws, axis=-1)                     # (tb, 128) f32
    out_ref[...] = scores.astype(out_ref.dtype)


def _pick_row_tile(n_rows_pad128, n_hidden, itemsize):
    """Rows per grid step: multiple of 128, VMEM-budgeted, sublane-friendly."""
    per_buffer_budget = 8 << 20  # bytes per pipeline buffer; << scoped VMEM everywhere
    cap = (per_buffer_budget // max(1, n_hidden * itemsize)) // 1024 * 1024
    tn = min(4096, max(1024, cap))
    if n_rows_pad128 <= tn:
        # One block covering the whole (128-padded) row range: block == full
        # extent, so no (8,128) divisibility constraint applies.
        return n_rows_pad128
    # Multiple grid steps: tn is a multiple of 1024, so the output block's
    # sublane dim (tn // 128) is a multiple of 8.
    return tn


def discriminator_forward(feat, weight, summary):
    """feat: (N, H), weight: (H, H), summary: (H,) -> scores: (N,)"""
    N, H = feat.shape
    assert weight.shape == (H, H)
    assert summary.shape == (H,)

    # Grid-invariant tiny matvec: compute once in plain XLA, never per step.
    ws = jnp.matmul(
        weight.astype(jnp.float32), summary.astype(jnp.float32)
    ).reshape(1, H)

    itemsize = jnp.dtype(feat.dtype).itemsize
    n_rows_pad128 = -(-N // 128) * 128
    tn = _pick_row_tile(n_rows_pad128, H, itemsize)
    n_pad = -(-N // tn) * tn
    if n_pad != N:
        feat = jnp.pad(feat, ((0, n_pad - N), (0, 0)))

    tb = tn // 128
    feat3 = feat.reshape(n_pad // 128, 128, H)  # lane-dense row slab

    out = pl.pallas_call(
        _discriminator_kernel,
        out_shape=jax.ShapeDtypeStruct((n_pad // 128, 128), feat.dtype),
        grid_spec=pltpu.PrefetchScalarGridSpec(
            num_scalar_prefetch=0,
            grid=(n_pad // tn,),
            in_specs=[
                pl.BlockSpec((tb, 128, H), lambda i: (i, 0, 0)),  # feat row tile
                pl.BlockSpec((1, H), lambda i: (0, 0)),           # W @ summary
            ],
            out_specs=pl.BlockSpec((tb, 128), lambda i: (i, 0)),
        ),
        compiler_params=pltpu.CompilerParams(
            dimension_semantics=("parallel",),
        ),
    )(feat3, ws)

    return out.reshape(n_pad)[:N]


if __name__ == "__main__":
    n_hidden = 32
    n_nodes = 16

    key = jax.random.PRNGKey(0)
    k_feat, k_sum, k_w = jax.random.split(key, 3)

    # Deterministic parameter init matching uniform_(-bound, bound)
    bound = 1.0 / math.sqrt(n_hidden)
    weight = jax.random.uniform(
        k_w, (n_hidden, n_hidden), minval=-bound, maxval=bound, dtype=jnp.float32
    )
    feat = jax.random.normal(k_feat, (n_nodes, n_hidden), dtype=jnp.float32)
    summary = jax.random.normal(k_sum, (n_hidden,), dtype=jnp.float32)

    scores = jax.block_until_ready(discriminator_forward(feat, weight, summary))
    ref = feat @ (weight @ summary)
    assert scores.shape == (n_nodes,)
    assert jnp.allclose(scores, ref, atol=1e-5, rtol=1e-5)

    # Larger shape to exercise the padded, multi-step streaming grid path.
    n_nodes2 = 5000
    k2f, k2s = jax.random.split(jax.random.PRNGKey(1))
    feat2 = jax.random.normal(k2f, (n_nodes2, n_hidden), dtype=jnp.float32)
    summary2 = jax.random.normal(k2s, (n_hidden,), dtype=jnp.float32)
    scores2 = jax.block_until_ready(discriminator_forward(feat2, weight, summary2))
    ref2 = feat2 @ (weight @ summary2)
    assert scores2.shape == (n_nodes2,)
    assert jnp.allclose(scores2, ref2, atol=1e-4, rtol=1e-4)

    print("KERNEL_OK")
</pallas_src>

<mosaic_0001>
module attributes {stable_mosaic.version = 11 : i64} {
  func.func @_discriminator_kernel(%arg0: i32, %arg1: memref<1x128x32xf32, #tpu.memory_space<vmem>>, %arg2: memref<1x32xf32, #tpu.memory_space<vmem>>, %arg3: memref<1x128xf32, #tpu.memory_space<vmem>>) attributes {dimension_semantics = [#tpu.dimension_semantics<parallel>], iteration_bounds = array<i64: 1>, scalar_prefetch = 0 : i64, scratch_operands = 0 : i64, tpu.core_type = #tpu.core_type<tc>, window_params = [{transform_indices = @transform_0, window_bounds = array<i64: 1, 128, 32>}, {pipeline_mode = #tpu.pipeline_mode<synchronous>, transform_indices = @transform_1, window_bounds = array<i64: 1, 32>}, {transform_indices = @transform_2, window_bounds = array<i64: 1, 128>}]} {
    %c0 = arith.constant 0 : index
    %c0_0 = arith.constant 0 : index
    %c0_1 = arith.constant 0 : index
    %0 = vector.load %arg1[%c0, %c0_0, %c0_1] : memref<1x128x32xf32, #tpu.memory_space<vmem>>, vector<1x128x32xf32>
    %c0_2 = arith.constant 0 : index
    %c0_3 = arith.constant 0 : index
    %1 = vector.load %arg2[%c0_2, %c0_3] : memref<1x32xf32, #tpu.memory_space<vmem>>, vector<1x32xf32>
    %2 = vector.shape_cast %1 : vector<1x32xf32> to vector<1x1x32xf32>
    %3 = vector.broadcast %2 : vector<1x1x32xf32> to vector<1x128x32xf32>
    %4 = arith.mulf %0, %3 : vector<1x128x32xf32>
    %cst = arith.constant dense<0.000000e+00> : vector<1x128xf32>
    %5 = vector.multi_reduction <add>, %4, %cst [2] : vector<1x128x32xf32> to vector<1x128xf32>
    %c0_4 = arith.constant 0 : index
    %c0_5 = arith.constant 0 : index
    %6 = vector.load %arg3[%c0_4, %c0_5] : memref<1x128xf32, #tpu.memory_space<vmem>>, vector<1x128xf32>
    tpu.vector_store %arg3[%c0_4, %c0_5], %5 {strides = array<i32>} : memref<1x128xf32, #tpu.memory_space<vmem>>, vector<1x128xf32>,
    return
  }
  func.func @transform_0(%arg0: i32) -> (i32, i32, i32) {
    %c0_i32 = arith.constant 0 : i32
    %c0_i32_0 = arith.constant 0 : i32
    %c0_i32_1 = arith.constant 0 : i32
    return %arg0, %c0_i32, %c0_i32_0 : i32, i32, i32
  }
  func.func @transform_1(%arg0: i32) -> (i32, i32) {
    %c0_i32 = arith.constant 0 : i32
    %c0_i32_0 = arith.constant 0 : i32
    %c0_i32_1 = arith.constant 0 : i32
    return %c0_i32, %c0_i32_0 : i32, i32
  }
  func.func @transform_2(%arg0: i32) -> (i32, i32) {
    %c0_i32 = arith.constant 0 : i32
    %c0_i32_0 = arith.constant 0 : i32
    return %arg0, %c0_i32 : i32, i32
  }
}

</mosaic_0001>

<llo_original>
// kernel: tpu_custom_call.1
$region0: #{tpu_custom_call.1}
  #allocation0 [shape = 'u32[]', space=smem, size = 0x4, offset = 0x4, fixed_abs, tag = 'smem constant byte address 0x4 - core index']
  #allocation1 [shape = 'u32[144,128]{1,0:T(1,128)}', space=vmem, size = 0x12000, scoped, tag = 'internal scratch']
  %s0 = inlined_call_operand.vmem [shape: f32[1,128,32], index: 0, kind: input, shape index: {}]
  %s1 = inlined_call_operand.vmem [shape: f32[1,32], index: 1, kind: input, shape index: {}]
  %s2 = inlined_call_operand.hbm [shape: f32[1,128], index: 2, kind: output, shape index: {}]
  %s3 = sld [smem:[#allocation0]]
  $region18: #{tpu_custom_call.1} parent=0
    _
  %s5 = ssub.s32 1, %s3
  %s6 = scalar_select 0, %s5, %s3
  $region1: #{tpu_custom_call.1} parent=0
    #allocation2 [shape = 'u8[512]{0}', space=vmem, size = 0x400, scoped, tag = 'output window, operand 0, single buffered']
    #allocation3 [shape = 's32[1]{0}', space=sflag, size = 0x4, scoped, tag = 'scoped memory for tpu_custom_call.1']
    %7 = vsyncpa [#allocation3], 0
    // Predicated region
    $region2: #{tpu_custom_call.1} parent=1 // pred_check
      _
    $region3: #{tpu_custom_call.1} parent=1 // pred_check_branch
      %9 = sbr.rel (0) target = $region5
    $region4: #{tpu_custom_call.1} parent=1 // pred_region
      _
    $region5: #{tpu_custom_call.1} parent=1 // pred_fallthru
      _
    // Predicated region
    $region6: #{tpu_custom_call.1} parent=1 // pred_check
      _
    $region7: #{tpu_custom_call.1} parent=1 // pred_check_branch
      %11 = sbr.rel (0) target = $region9
    $region8: #{tpu_custom_call.1} parent=1 // pred_region
      _
    $region9: #{tpu_custom_call.1} parent=1 // pred_fallthru
      _
    %v12 = vld [vmem:[%s0] sm:$0xff]
    %v13 = vld [vmem:[%s0 + $0x8] sm:$0xff]
    %v14 = vld [vmem:[%s0 + $0x10] sm:$0xff]
    %v15 = vld [vmem:[%s0 + $0x18] sm:$0xff]
    %v16 = vld [vmem:[%s0 + $0x20] sm:$0xff]
    %v17 = vld [vmem:[%s0 + $0x28] sm:$0xff]
    %v18 = vld [vmem:[%s0 + $0x30] sm:$0xff]
    %v19 = vld [vmem:[%s0 + $0x38] sm:$0xff]
    %v20 = vld [vmem:[%s0 + $0x40] sm:$0xff]
    %v21 = vld [vmem:[%s0 + $0x48] sm:$0xff]
    %v22 = vld [vmem:[%s0 + $0x50] sm:$0xff]
    %v23 = vld [vmem:[%s0 + $0x58] sm:$0xff]
    %v24 = vld [vmem:[%s0 + $0x60] sm:$0xff]
    %v25 = vld [vmem:[%s0 + $0x68] sm:$0xff]
    %v26 = vld [vmem:[%s0 + $0x70] sm:$0xff]
    %v27 = vld [vmem:[%s0 + $0x78] sm:$0xff]
    %v28 = vld [vmem:[%s1] sm:$0x1]
    %v30 = vlaneseq
    %v31 = vshrl.u32 %v30, 7
    %v32 = vsub.s32 0, %v31
    %v33 = vrot.slane %v28, %v32
    %v35 = vmul.f32 %v12, %v33
    %v36 = vmul.f32 %v13, %v33
    %v37 = vmul.f32 %v14, %v33
    %v38 = vmul.f32 %v15, %v33
    %v39 = vmul.f32 %v16, %v33
    %v40 = vmul.f32 %v17, %v33
    %v41 = vmul.f32 %v18, %v33
    %v42 = vmul.f32 %v19, %v33
    %v43 = vmul.f32 %v20, %v33
    %v44 = vmul.f32 %v21, %v33
    %v45 = vmul.f32 %v22, %v33
    %v46 = vmul.f32 %v23, %v33
    %v47 = vmul.f32 %v24, %v33
    %v48 = vmul.f32 %v25, %v33
    %v49 = vmul.f32 %v26, %v33
    %v50 = vmul.f32 %v27, %v33
    %vm51 = vcmask 261120
    %v52 = vsel %vm51, %v35, 0.0
    %53 = vadd.xlane.f32.xlu0 %v52
    %v54 = vpop.xlane.xlu0 %53
    %v55 = vsel %vm51, %v36, 0.0
    %56 = vadd.xlane.f32.xlu0 %v55
    %v57 = vpop.xlane.xlu0 %56
    %v58 = vsel %vm51, %v37, 0.0
    %59 = vadd.xlane.f32.xlu0 %v58
    %v60 = vpop.xlane.xlu0 %59
    %v61 = vsel %vm51, %v38, 0.0
    %62 = vadd.xlane.f32.xlu0 %v61
    %v63 = vpop.xlane.xlu0 %62
    %v64 = vsel %vm51, %v39, 0.0
    %65 = vadd.xlane.f32.xlu0 %v64
    %v66 = vpop.xlane.xlu0 %65
    %v67 = vsel %vm51, %v40, 0.0
    %68 = vadd.xlane.f32.xlu0 %v67
    %v69 = vpop.xlane.xlu0 %68
    %v70 = vsel %vm51, %v41, 0.0
    %71 = vadd.xlane.f32.xlu0 %v70
    %v72 = vpop.xlane.xlu0 %71
    %v73 = vsel %vm51, %v42, 0.0
    %74 = vadd.xlane.f32.xlu0 %v73
    %v75 = vpop.xlane.xlu0 %74
    %v76 = vsel %vm51, %v43, 0.0
    %77 = vadd.xlane.f32.xlu0 %v76
    %v78 = vpop.xlane.xlu0 %77
    %v79 = vsel %vm51, %v44, 0.0
    %80 = vadd.xlane.f32.xlu0 %v79
    %v81 = vpop.xlane.xlu0 %80
    %v82 = vsel %vm51, %v45, 0.0
    %83 = vadd.xlane.f32.xlu0 %v82
    %v84 = vpop.xlane.xlu0 %83
    %v85 = vsel %vm51, %v46, 0.0
    %86 = vadd.xlane.f32.xlu0 %v85
    %v87 = vpop.xlane.xlu0 %86
    %v88 = vsel %vm51, %v47, 0.0
    %89 = vadd.xlane.f32.xlu0 %v88
    %v90 = vpop.xlane.xlu0 %89
    %v91 = vsel %vm51, %v48, 0.0
    %92 = vadd.xlane.f32.xlu0 %v91
    %v93 = vpop.xlane.xlu0 %92
    %v94 = vsel %vm51, %v49, 0.0
    %95 = vadd.xlane.f32.xlu0 %v94
    %v96 = vpop.xlane.xlu0 %95
    %v97 = vsel %vm51, %v50, 0.0
    %98 = vadd.xlane.f32.xlu0 %v97
    %v99 = vpop.xlane.xlu0 %98
    %v116 = vlaneseq
    %v117 = vand.u32 %v116, 127
    %v118 = vlaneseq
    %v119 = vshrl.u32 %v118, 7
    %v120 = vsub.s32 %v117, %v119
    %v121 = vrot.slane %v54, %v120
    %v122 = vadd.s32 %v117, 4294967288
    %v123 = vlaneseq
    %v124 = vshrl.u32 %v123, 7
    %v125 = vsub.s32 %v122, %v124
    %v126 = vrot.slane %v57, %v125
    %vm127 = vcmask 130112
    %v128 = vsel %vm127, %v126, %v121
    %v129 = vadd.s32 %v117, 4294967280
    %v130 = vlaneseq
    %v131 = vshrl.u32 %v130, 7
    %v132 = vsub.s32 %v129, %v131
    %v133 = vrot.slane %v60, %v132
    %vm134 = vcmask 195712
    %v135 = vsel %vm134, %v133, %v128
    %v136 = vadd.s32 %v117, 4294967272
    %v137 = vlaneseq
    %v138 = vshrl.u32 %v137, 7
    %v139 = vsub.s32 %v136, %v138
    %v140 = vrot.slane %v63, %v139
    %vm141 = vcmask 261312
    %v142 = vsel %vm141, %v140, %v135
    %v143 = vadd.s32 %v117, 4294967264
    %v144 = vlaneseq
    %v145 = vshrl.u32 %v144, 7
    %v146 = vsub.s32 %v143, %v145
    %v147 = vrot.slane %v66, %v146
    %vm148 = vcmask 326912
    %v149 = vsel %vm148, %v147, %v142
    %v150 = vadd.s32 %v117, 4294967256
    %v151 = vlaneseq
    %v152 = vshrl.u32 %v151, 7
    %v153 = vsub.s32 %v150, %v152
    %v154 = vrot.slane %v69, %v153
    %vm155 = vcmask 392512
    %v156 = vsel %vm155, %v154, %v149
    %v157 = vadd.s32 %v117, 4294967248
    %v158 = vlaneseq
    %v159 = vshrl.u32 %v158, 7
    %v160 = vsub.s32 %v157, %v159
    %v161 = vrot.slane %v72, %v160
    %vm162 = vcmask 458112
    %v163 = vsel %vm162, %v161, %v156
    %v164 = vadd.s32 %v117, 4294967240
    %v165 = vlaneseq
    %v166 = vshrl.u32 %v165, 7
    %v167 = vsub.s32 %v164, %v166
    %v168 = vrot.slane %v75, %v167
    %vm169 = vcmask 523712
    %v170 = vsel %vm169, %v168, %v163
    %v171 = vadd.s32 %v117, 4294967232
    %v172 = vlaneseq
    %v173 = vshrl.u32 %v172, 7
    %v174 = vsub.s32 %v171, %v173
    %v175 = vrot.slane %v78, %v174
    %vm176 = vcmask 589312
    %v177 = vsel %vm176, %v175, %v170
    %v178 = vadd.s32 %v117, 4294967224
    %v179 = vlaneseq
    %v180 = vshrl.u32 %v179, 7
    %v181 = vsub.s32 %v178, %v180
    %v182 = vrot.slane %v81, %v181
    %vm183 = vcmask 654912
    %v184 = vsel %vm183, %v182, %v177
    %v185 = vadd.s32 %v117, 4294967216
    %v186 = vlaneseq
    %v187 = vshrl.u32 %v186, 7
    %v188 = vsub.s32 %v185, %v187
    %v189 = vrot.slane %v84, %v188
    %vm190 = vcmask 720512
    %v191 = vsel %vm190, %v189, %v184
    %v192 = vadd.s32 %v117, 4294967208
    %v193 = vlaneseq
    %v194 = vshrl.u32 %v193, 7
    %v195 = vsub.s32 %v192, %v194
    %v196 = vrot.slane %v87, %v195
    %vm197 = vcmask 786112
    %v198 = vsel %vm197, %v196, %v191
    %v199 = vadd.s32 %v117, 4294967200
    %v200 = vlaneseq
    %v201 = vshrl.u32 %v200, 7
    %v202 = vsub.s32 %v199, %v201
    %v203 = vrot.slane %v90, %v202
    %vm204 = vcmask 851712
    %v205 = vsel %vm204, %v203, %v198
    %v206 = vadd.s32 %v117, 4294967192
    %v207 = vlaneseq
    %v208 = vshrl.u32 %v207, 7
    %v209 = vsub.s32 %v206, %v208
    %v210 = vrot.slane %v93, %v209
    %vm211 = vcmask 917312
    %v212 = vsel %vm211, %v210, %v205
    %v213 = vadd.s32 %v117, 4294967184
    %v214 = vlaneseq
    %v215 = vshrl.u32 %v214, 7
    %v216 = vsub.s32 %v213, %v215
    %v217 = vrot.slane %v96, %v216
    %vm218 = vcmask 982912
    %v219 = vsel %vm218, %v217, %v212
    %v220 = vadd.s32 %v117, 4294967176
    %v221 = vlaneseq
    %v222 = vshrl.u32 %v221, 7
    %v223 = vsub.s32 %v220, %v222
    %v224 = vrot.slane %v99, %v223
    %vm225 = vcmask 1048512
    %v226 = vsel %vm225, %v224, %v219
    %228 = vst [vmem:[#allocation2] sm:$0x1] %v226
    // Predicated region
    $region10: #{tpu_custom_call.1} parent=1 // pred_check
      _
    $region11: #{tpu_custom_call.1} parent=1 // pred_check_branch
      %230 = sbr.rel (0) target = $region13
    $region12: #{tpu_custom_call.1} parent=1 // pred_region
      %s232 = ssub.s32 16, 16
      %233 = vsyncadd [#allocation3], %s232
      %s235 = sshll.u32 [#allocation2], 4
      %s236 = int_to_ptr.vmem [resolvable:$true] %s235
      %238 = dma.vmem_to_hbm [thread:$0]  %s236, 16, %s2, [#allocation3]
    $region13: #{tpu_custom_call.1} parent=1 // pred_fallthru
      _
    // Predicated region
    $region14: #{tpu_custom_call.1} parent=1 // pred_check
      _
    $region15: #{tpu_custom_call.1} parent=1 // pred_check_branch
      %240 = sbr.rel (0) target = $region17
    $region16: #{tpu_custom_call.1} parent=1 // pred_region
      %241 = dma.done [#allocation3], 16
    $region17: #{tpu_custom_call.1} parent=1 // pred_fallthru
      _
    %242 = vsyncpa [#allocation3], 1

</llo_original>
